<compile_context>
chip_gen: v5e
topology: v5e:2x2
jax: 0.10.0
libtpu: 0.0.40
codegen_flags: <defaults>
</compile_context>

<pallas_src>
import jax
import jax.numpy as jnp
from jax.experimental import pallas as pl
from jax.experimental.pallas import tpu as pltpu


def _round_up(x, m):
    return ((x + m - 1) // m) * m


def _embed_kernel(feat_ref, w1_ref, b1_ref, feats_ref):
    # feats = feat @ W1 + b1.
    # feat tile arrives as f32 (single HBM pass) and is cast to bf16 on the
    # VPU here; W1 is bf16 and VMEM-resident; MXU accumulates in f32; the
    # bias add stays f32; the store casts to the output dtype (bf16 default).
    a = feat_ref[...].astype(jnp.bfloat16)
    acc = jnp.dot(a, w1_ref[...], preferred_element_type=jnp.float32)
    feats_ref[...] = (acc + b1_ref[...]).astype(feats_ref.dtype)


def _run_model_pallas(feat, w1_bf16, b1, *, out_dtype=jnp.bfloat16,
                      tb_max=2048, vmem_budget_bytes=12 * 1024 * 1024):
    """feats = feat @ W1 + b1, batch-tiled; W1/b1 pinned in VMEM."""
    B, D = feat.shape
    H = w1_bf16.shape[1]

    b1_f32 = b1.astype(jnp.float32).reshape(1, H)
    out_bytes = jnp.dtype(out_dtype).itemsize

    # ---- batch-tile selection ------------------------------------------
    # 1) Large tiles amortize the ~0.35us per-grid-step overhead.
    tb = tb_max
    # 2) Keep at least 2 grid steps (when B allows) so the "parallel" batch
    #    axis can actually be split across v7x's two TensorCores and the
    #    input/output double-buffering overlaps DMA with compute.
    if B > 8:
        tb = min(tb, _round_up(pl.cdiv(B, 2), 8))
    # 3) Respect a VMEM budget that fits every generation's default scoped
    #    limit (16 MiB v5e, 32 MiB v6e/v7x).  Resident: W1 (bf16) + b1.
    #    Double-buffered: f32 feat tile + out tile.
    resident = D * H * 2 + H * 4
    per_row = 2 * D * 4 + 2 * H * out_bytes
    tb_cap = max(8, ((vmem_budget_bytes - resident) // per_row) // 8 * 8)
    tb = max(8, min(tb, tb_cap))

    grid = (pl.cdiv(B, tb),)   # ragged last tile handled by partial blocks

    vmem_need = resident + tb * per_row
    compiler_params = pltpu.CompilerParams(
        dimension_semantics=("parallel",),          # 2 TCs on v7x
        vmem_limit_bytes=(int(vmem_need * 2)
                          if vmem_need > (16 << 20) else None),
    )

    cost = pl.CostEstimate(
        flops=2 * B * D * H,
        transcendentals=0,
        bytes_accessed=(B * D * 4            # feat stream (f32, single pass)
                        + D * H * 2          # W1 (bf16, read once)
                        + H * 4              # b1 (f32)
                        + B * H * out_bytes  # feats writeback
                        ),
    )

    feats = pl.pallas_call(
        _embed_kernel,
        out_shape=jax.ShapeDtypeStruct((B, H), out_dtype),
        grid=grid,
        in_specs=[
            pl.BlockSpec((tb, D), lambda i: (i, 0)),   # streamed f32 feat tiles
            pl.BlockSpec((D, H), lambda i: (0, 0)),    # W1 (bf16) pinned in VMEM
            pl.BlockSpec((1, H), lambda i: (0, 0)),    # b1 (f32) pinned in VMEM
        ],
        out_specs=pl.BlockSpec((tb, H), lambda i: (i, 0)),
        compiler_params=compiler_params,
        cost_estimate=cost,
    )(feat.astype(jnp.float32), w1_bf16, b1_f32)
    return feats


def model_wrapper_forward(inputs, params, *, out_dtype=jnp.bfloat16):
    """JAX/Pallas equivalent of ModelWrapper.forward.

    inputs: (feat, labels, spk, utt, tag)
    returns: (feats, spk)
    """
    feat, labels, spk, utt, tag = inputs
    w1, b1, w2, b2 = params
    # fc_outputs (feats @ W2 + b2) is discarded by the wrapper -> not computed.
    del w2, b2, labels, utt, tag
    # W1 is cast to bf16 once here (in real use it would be cached with the
    # parameters); the per-call activation (feat) is cast inside the kernel.
    feats = _run_model_pallas(feat, w1.astype(jnp.bfloat16), b1,
                              out_dtype=out_dtype)
    return (feats, spk)


if __name__ == "__main__":
    key = jax.random.PRNGKey(0)
    k_feat, k_w1, k_b1, k_w2, k_b2, k_spk, k_lab = jax.random.split(key, 7)

    # Batch chosen NOT tile-aligned to exercise the un-padded partial-block
    # path; feature/embedding dims kept lane-dense (multiples of 128).
    B, D, H, C = 200, 128, 128, 8

    # Deterministic synthetic parameters (shapes implied by the forward pass).
    w1 = jax.random.normal(k_w1, (D, H), jnp.float32) * 0.05
    b1 = jax.random.normal(k_b1, (1, H), jnp.float32) * 0.01
    w2 = jax.random.normal(k_w2, (H, C), jnp.float32) * 0.05   # unused (fc head dropped)
    b2 = jax.random.normal(k_b2, (1, C), jnp.float32) * 0.01   # unused (fc head dropped)
    params = (w1, b1, w2, b2)

    # Deterministic synthetic inputs mimicking (feat, labels, spk, utt, tag).
    feat = jax.random.normal(k_feat, (B, D), jnp.float32)
    labels = jax.random.randint(k_lab, (B,), 0, C, jnp.int32)
    spk = jax.random.randint(k_spk, (B,), 0, 16, jnp.int32)
    utt = jnp.arange(B, dtype=jnp.int32)   # stand-in for utterance ids
    tag = jnp.zeros((B,), jnp.int32)       # stand-in for tag strings
    inputs = (feat, labels, spk, utt, tag)

    feats_out, spk_out = model_wrapper_forward(inputs, params)
    jax.block_until_ready((feats_out, spk_out))

    # Reference in plain JAX using the same bf16-cast operands and f32
    # accumulation; tolerances cover the bf16 output quantization.
    feat_bf = feat.astype(jnp.bfloat16).astype(jnp.float32)
    w1_bf = w1.astype(jnp.bfloat16).astype(jnp.float32)
    feats_ref = jnp.dot(feat_bf, w1_bf,
                        preferred_element_type=jnp.float32) + b1

    assert feats_out.shape == (B, H)
    assert feats_out.dtype == jnp.bfloat16
    assert jnp.allclose(feats_out.astype(jnp.float32), feats_ref,
                        atol=2e-2, rtol=2e-2)
    assert jnp.array_equal(spk_out, spk)

    print("KERNEL_OK")
</pallas_src>

<mosaic_0001>
module attributes {stable_mosaic.version = 11 : i64} {
  func.func @_embed_kernel(%arg0: i32, %arg1: memref<104x128xf32, #tpu.memory_space<vmem>>, %arg2: memref<128x128xbf16, #tpu.memory_space<vmem>>, %arg3: memref<1x128xf32, #tpu.memory_space<vmem>>, %arg4: memref<104x128xbf16, #tpu.memory_space<vmem>>) attributes {dimension_semantics = [#tpu.dimension_semantics<parallel>], iteration_bounds = array<i64: 2>, scalar_prefetch = 0 : i64, scratch_operands = 0 : i64, tpu.core_type = #tpu.core_type<tc>, window_params = [{transform_indices = @transform_0, window_bounds = array<i64: 104, 128>}, {pipeline_mode = #tpu.pipeline_mode<synchronous>, transform_indices = @transform_1, window_bounds = array<i64: 128, 128>}, {pipeline_mode = #tpu.pipeline_mode<synchronous>, transform_indices = @transform_2, window_bounds = array<i64: 1, 128>}, {transform_indices = @transform_3, window_bounds = array<i64: 104, 128>}]} {
    %c0 = arith.constant 0 : index
    %c0_0 = arith.constant 0 : index
    %0 = vector.load %arg1[%c0, %c0_0] : memref<104x128xf32, #tpu.memory_space<vmem>>, vector<104x128xf32>
    %1 = arith.truncf %0 : vector<104x128xf32> to vector<104x128xbf16>
    %c0_1 = arith.constant 0 : index
    %c0_2 = arith.constant 0 : index
    %2 = vector.load %arg2[%c0_1, %c0_2] : memref<128x128xbf16, #tpu.memory_space<vmem>>, vector<128x128xbf16>
    %cst = arith.constant dense<0.000000e+00> : vector<104x128xf32>
    %3 = tpu.matmul %1, %2, %cst {dimension_numbers = #tpu.dot_dimension_numbers<[1], [0], [0], [1], [0, 0, 1, 1], [], []>} : vector<104x128xbf16>, vector<128x128xbf16>, vector<104x128xf32> -> vector<104x128xf32>
    %c0_3 = arith.constant 0 : index
    %c0_4 = arith.constant 0 : index
    %4 = vector.load %arg3[%c0_3, %c0_4] : memref<1x128xf32, #tpu.memory_space<vmem>>, vector<1x128xf32>
    %5 = vector.broadcast %4 : vector<1x128xf32> to vector<104x128xf32>
    %6 = arith.addf %3, %5 : vector<104x128xf32>
    %7 = arith.truncf %6 : vector<104x128xf32> to vector<104x128xbf16>
    %c0_5 = arith.constant 0 : index
    %c0_6 = arith.constant 0 : index
    %8 = vector.load %arg4[%c0_5, %c0_6] : memref<104x128xbf16, #tpu.memory_space<vmem>>, vector<104x128xbf16>
    tpu.vector_store %arg4[%c0_5, %c0_6], %7 {strides = array<i32>} : memref<104x128xbf16, #tpu.memory_space<vmem>>, vector<104x128xbf16>,
    return
  }
  func.func @transform_0(%arg0: i32) -> (i32, i32) {
    %c0_i32 = arith.constant 0 : i32
    %c0_i32_0 = arith.constant 0 : i32
    return %arg0, %c0_i32 : i32, i32
  }
  func.func @transform_1(%arg0: i32) -> (i32, i32) {
    %c0_i32 = arith.constant 0 : i32
    %c0_i32_0 = arith.constant 0 : i32
    %c0_i32_1 = arith.constant 0 : i32
    return %c0_i32, %c0_i32_0 : i32, i32
  }
  func.func @transform_2(%arg0: i32) -> (i32, i32) {
    %c0_i32 = arith.constant 0 : i32
    %c0_i32_0 = arith.constant 0 : i32
    %c0_i32_1 = arith.constant 0 : i32
    return %c0_i32, %c0_i32_0 : i32, i32
  }
  func.func @transform_3(%arg0: i32) -> (i32, i32) {
    %c0_i32 = arith.constant 0 : i32
    %c0_i32_0 = arith.constant 0 : i32
    return %arg0, %c0_i32 : i32, i32
  }
}

</mosaic_0001>

<llo_original>
// kernel: tpu_custom_call.1
$region0: #{tpu_custom_call.1}
  #allocation0 [shape = 'u32[]', space=smem, size = 0x4, offset = 0x4, fixed_abs, tag = 'smem constant byte address 0x4 - core index']
  #allocation1 [shape = 'u32[72,128]{1,0:T(1,128)}', space=vmem, size = 0x9000, scoped, tag = 'internal scratch']
  %s0 = inlined_call_operand.hbm [shape: f32[200,128], index: 0, kind: input, shape index: {}]
  %s1 = inlined_call_operand.hbm [shape: bf16[128,128], index: 1, kind: input, shape index: {}]
  %s2 = inlined_call_operand.vmem [shape: f32[1,128], index: 2, kind: input, shape index: {}]
  %s3 = inlined_call_operand.hbm [shape: bf16[200,128], index: 3, kind: output, shape index: {}]
  %s4 = sld [smem:[#allocation0]]
  $region53: #{tpu_custom_call.1} parent=0
    _
  %s6 = ssub.s32 1, %s4
  %s7 = scalar_select 0, %s6, %s4
  $region1: #{tpu_custom_call.1} parent=0
    #allocation2 [shape = 'u8[106496]{0}', space=vmem, size = 0x1a000, scoped, tag = 'input window, operand 0']
    #allocation3 [shape = 's32[2]{0}', space=sflag, size = 0x8, scoped, tag = 'scoped memory for tpu_custom_call.1']
    #allocation4 [shape = 's32[2]{0}', space=sflag, size = 0x8, scoped, tag = 'scoped memory for tpu_custom_call.1']
    #allocation5 [shape = 'u8[32768]{0}', space=vmem, size = 0x8000, scoped, tag = 'input window, operand 1, single buffered']
    #allocation6 [shape = 's32[1]{0}', space=sflag, size = 0x4, scoped, tag = 'scoped memory for tpu_custom_call.1']
    #allocation7 [shape = 'u8[53248]{0}', space=vmem, size = 0xd000, scoped, tag = 'output window, operand 0']
    %8 = vsyncpa [#allocation3], 0
    %s9 = scalar_lea.sflag [#allocation3], 1
    %10 = vsyncpa %s9, 0
    %11 = vsyncpa [#allocation6], 0
    %12 = vsyncpa [#allocation4], 0
    %s13 = scalar_lea.sflag [#allocation4], 1
    %14 = vsyncpa %s13, 0
    loop: start=0, step=1, limit=4
    $region2: #{tpu_custom_call.1} parent=1 // loop_pre_header
      _
    $region3: #{tpu_custom_call.1} parent=1 // loop_header
      %s16 = sphi 0, %s20
      %p17 = scmp.ge.s32.totalorder %s16, 4
      %s26 = sphi 0, %s28
      %s29 = sphi 0, %s26
      %s30 = sphi 0, %s29
      %s46 = sphi 0, %s30
      %s50 = sphi 0, %s50
      %s52 = sphi 0, %s50
      %s53 = sphi 0, %s52
      %s67 = sphi 0, %s53
      %s71 = sphi 0, %s71
      %s73 = sphi 0, %s71
      %s74 = sphi 0, %s73
      %s88 = sphi 0, %s74
      %s94 = sphi 0, %s96
      %s97 = sphi 0, %s94
      %s98 = sphi 0, %s97
      %s114 = sphi 0, %s98
    $region4: #{tpu_custom_call.1} parent=1 // loop_header_branch
      %19 = sbr.rel (%p17) target = $region8
    $region5: #{tpu_custom_call.1} parent=1 // loop_body
      %s21 = ssub.s32 %s16, 1
      %s22 = ssub.s32 %s16, 2
      %s23 = sadd.s32 %s16, 1
      %s24 = ssub.s32 %s16, %s23
      %p25 = scmp.eq.s32.totalorder %s24, 0
      %s27 = sadd.s32 %s26, 1
      %s28 = scalar_select %p25, %s26, %s27
      %p31 = pneg %p25
      %p32 = scmp.eq.s32.totalorder %s16, 1
      %p33 = por %p31, %p32
      %p34 = scmp.ne.s32.totalorder %s26, %s29
      %p35 = scmp.eq.s32.totalorder %s16, 0
      %p36 = por %p34, %p35
      %p37 = scmp.ne.s32.totalorder %s26, %s29
      %p38 = scmp.eq.s32.totalorder %s21, 1
      %p39 = por %p37, %p38
      %p40 = scmp.ne.s32.totalorder %s29, %s30
      %p41 = scmp.eq.s32.totalorder %s21, 0
      %p42 = por %p40, %p41
      %p43 = scmp.ne.s32.totalorder %s29, %s30
      %p44 = scmp.eq.s32.totalorder %s22, 1
      %p45 = por %p43, %p44
      %p47 = scmp.ne.s32.totalorder %s30, %s46
      %p48 = scmp.eq.s32.totalorder %s22, 0
      %p49 = por %p47, %p48
      %s51 = sadd.s32 %s50, 1
      %p54 = scmp.eq.s32.totalorder %s16, 1
      %p55 = scmp.ne.s32.totalorder %s50, %s52
      %p56 = scmp.eq.s32.totalorder %s16, 0
      %p57 = por %p55, %p56
      %p58 = scmp.ne.s32.totalorder %s50, %s52
      %p59 = scmp.eq.s32.totalorder %s21, 1
      %p60 = por %p58, %p59
      %p61 = scmp.ne.s32.totalorder %s52, %s53
      %p62 = scmp.eq.s32.totalorder %s21, 0
      %p63 = por %p61, %p62
      %p64 = scmp.ne.s32.totalorder %s52, %s53
      %p65 = scmp.eq.s32.totalorder %s22, 1
      %p66 = por %p64, %p65
      %p68 = scmp.ne.s32.totalorder %s53, %s67
      %p69 = scmp.eq.s32.totalorder %s22, 0
      %p70 = por %p68, %p69
      %s72 = sadd.s32 %s71, 1
      %p75 = scmp.eq.s32.totalorder %s16, 1
      %p76 = scmp.ne.s32.totalorder %s71, %s73
      %p77 = scmp.eq.s32.totalorder %s16, 0
      %p78 = por %p76, %p77
      %p79 = scmp.ne.s32.totalorder %s71, %s73
      %p80 = scmp.eq.s32.totalorder %s21, 1
      %p81 = por %p79, %p80
      %p82 = scmp.ne.s32.totalorder %s73, %s74
      %p83 = scmp.eq.s32.totalorder %s21, 0
      %p84 = por %p82, %p83
      %p85 = scmp.ne.s32.totalorder %s73, %s74
      %p86 = scmp.eq.s32.totalorder %s22, 1
      %p87 = por %p85, %p86
      %p89 = scmp.ne.s32.totalorder %s74, %s88
      %p90 = scmp.eq.s32.totalorder %s22, 0
      %p91 = por %p89, %p90
      %s92 = ssub.s32 %s16, %s23
      %p93 = scmp.eq.s32.totalorder %s92, 0
      %s95 = sadd.s32 %s94, 1
      %s96 = scalar_select %p93, %s94, %s95
      %p99 = pneg %p93
      %p100 = scmp.eq.s32.totalorder %s16, 1
      %p101 = por %p99, %p100
      %p102 = scmp.ne.s32.totalorder %s94, %s97
      %p103 = scmp.eq.s32.totalorder %s16, 0
      %p104 = por %p102, %p103
      %p105 = scmp.ne.s32.totalorder %s94, %s97
      %p106 = scmp.eq.s32.totalorder %s21, 1
      %p107 = por %p105, %p106
      %p108 = scmp.ne.s32.totalorder %s97, %s98
      %p109 = scmp.eq.s32.totalorder %s21, 0
      %p110 = por %p108, %p109
      %p111 = scmp.ne.s32.totalorder %s97, %s98
      %p112 = scmp.eq.s32.totalorder %s22, 1
      %p113 = por %p111, %p112
      %p115 = scmp.ne.s32.totalorder %s98, %s114
      %p116 = scmp.eq.s32.totalorder %s22, 0
      %p117 = por %p115, %p116
      %p118 = scmp.le.s32.totalorder 1, %s16
      %p119 = scmp.lt.s32.totalorder %s16, 3
      %p120 = pnand %p118, %p119
      %p121 = pneg %p120
      // Predicated region
      $region9: #{tpu_custom_call.1} parent=5 // pred_check
        _
      $region10: #{tpu_custom_call.1} parent=5 // pred_check_branch
        %123 = sbr.rel (%p120) target = $region12
      $region11: #{tpu_custom_call.1} parent=5 // pred_region
        %s124 = ssub.s32 %s16, 1
        // Predicated region
        $region13: #{tpu_custom_call.1} parent=11 // pred_check
          %p125 = pneg %p63
        $region14: #{tpu_custom_call.1} parent=11 // pred_check_branch
          %127 = sbr.rel (%p125) target = $region16
        $region15: #{tpu_custom_call.1} parent=11 // pred_region
          %129 = vsyncadd [#allocation6], 0
          %s130 = sshll.u32 %s1, 4
          %s131 = int_to_ptr.hbm [resolvable:$true] %s130
          %s132 = sshll.u32 [#allocation5], 4
          %s133 = int_to_ptr.vmem [resolvable:$true] %s132
          %138 = dma.hbm_to_vmem [thread:$0]  %s131, 1024, %s133, [#allocation6], 64, 64, 4
        $region16: #{tpu_custom_call.1} parent=11 // pred_fallthru
          _
        // Predicated region
        $region17: #{tpu_custom_call.1} parent=11 // pred_check
          %p139 = pneg %p84
        $region18: #{tpu_custom_call.1} parent=11 // pred_check_branch
          %141 = sbr.rel (%p139) target = $region20
        $region19: #{tpu_custom_call.1} parent=11 // pred_region
          _
        $region20: #{tpu_custom_call.1} parent=11 // pred_fallthru
          _
      $region12: #{tpu_custom_call.1} parent=5 // pred_fallthru
        _
      %p142 = scmp.lt.s32.totalorder %s16, 2
      // Predicated region
      $region21: #{tpu_custom_call.1} parent=5 // pred_check
        %p143 = pneg %p142
      $region22: #{tpu_custom_call.1} parent=5 // pred_check_branch
        %145 = sbr.rel (%p143) target = $region24
      $region23: #{tpu_custom_call.1} parent=5 // pred_region
        // Predicated region
        $region25: #{tpu_custom_call.1} parent=23 // pred_check
          %p146 = pneg %p36
        $region26: #{tpu_custom_call.1} parent=23 // pred_check_branch
          %148 = sbr.rel (%p146) target = $region28
        $region27: #{tpu_custom_call.1} parent=23 // pred_region
          %s149 = sand.u32 %s26, 1
          %s150 = scalar_lea.sflag [#allocation3], %s149
          %s151 = sand.u32 %s26, 1
          %s152 = smul.addr %s151, 104
          %s153 = scalar_lea.vmem [#allocation2], %s152
          %s154 = smul.u32 13, %s16
          %s155 = ssub.s32 25, %s154
          %p156 = scmp.lt.s32.totalorder %s155, 13
          %s157 = scalar_select %p156, %s155, 13
          %s158 = smul.u32 8, %s157
          %s159 = ssub.s32 104, %s158
          %s160 = sshll.u32 %s159, 4
          %161 = vsyncadd %s150, %s160
          %p162 = scmp.ne.s32.totalorder 0, %s158
          %s163 = smul.addr %s154, 8
          %s164 = scalar_lea.hbm %s0, %s163
          %s165 = smul.u32 8, %s157
          %s166 = sshll.u32 %s164, 4
          %s167 = int_to_ptr.hbm [resolvable:$true] %s166
          %s168 = sshll.u32 %s153, 4
          %s169 = int_to_ptr.vmem [resolvable:$true] %s168
          %s170 = sshll.u32 %s165, 4
          %174 = dma.hbm_to_vmem [thread:$0]  (%p162), %s167, %s170, %s169, %s150, 128, 128, 8
        $region28: #{tpu_custom_call.1} parent=23 // pred_fallthru
          _
      $region24: #{tpu_custom_call.1} parent=5 // pred_fallthru
        _
      %p175 = scmp.le.s32.totalorder 1, %s16
      %p176 = scmp.lt.s32.totalorder %s16, 3
      %p177 = pnand %p175, %p176
      %p178 = pneg %p177
      // Predicated region
      $region29: #{tpu_custom_call.1} parent=5 // pred_check
        _
      $region30: #{tpu_custom_call.1} parent=5 // pred_check_branch
        %180 = sbr.rel (%p177) target = $region32
      $region31: #{tpu_custom_call.1} parent=5 // pred_region
        %s181 = ssub.s32 %s16, 1
        %s182 = sand.u32 %s29, 1
        %s183 = scalar_lea.sflag [#allocation3], %s182
        %s184 = sand.u32 %s29, 1
        %s185 = smul.addr %s184, 104
        %s186 = scalar_lea.vmem [#allocation2], %s185
        // Predicated region
        $region33: #{tpu_custom_call.1} parent=31 // pred_check
          %p187 = pneg %p42
        $region34: #{tpu_custom_call.1} parent=31 // pred_check_branch
          %189 = sbr.rel (%p187) target = $region36
        $region35: #{tpu_custom_call.1} parent=31 // pred_region
          %191 = dma.done %s183, 1664
        $region36: #{tpu_custom_call.1} parent=31 // pred_fallthru
          _
        // Predicated region
        $region37: #{tpu_custom_call.1} parent=31 // pred_check
          %p192 = pneg %p63
        $region38: #{tpu_custom_call.1} parent=31 // pred_check_branch
          %194 = sbr.rel (%p192) target = $region40
        $region39: #{tpu_custom_call.1} parent=31 // pred_region
          %196 = dma.done [#allocation6], 1024
        $region40: #{tpu_custom_call.1} parent=31 // pred_fallthru
          _
        %s197 = sand.u32 %s29, 1
        %s198 = scalar_lea.sflag [#allocation3], %s197
        %s199 = sand.u32 %s29, 1
        %s200 = smul.addr %s199, 104
        %s201 = scalar_lea.vmem [#allocation2], %s200
        %p202 = pneg %p42
        %p203 = pneg %p39
        %p204 = pneg %p63
        %p205 = pneg %p60
        %p206 = pneg %p84
        %p207 = pneg %p81
        %p208 = pneg %p110
        %p209 = pneg %p107
        %s210 = sand.u32 %s97, 1
        %s211 = scalar_lea.sflag [#allocation4], %s210
        %s212 = sand.u32 %s97, 1
        %s213 = smul.addr %s212, 52
        %s214 = scalar_lea.vmem [#allocation7], %s213
        %s215 = smul.u32 13, %s21
        %s216 = ssub.s32 25, %s215
        %p217 = scmp.lt.s32.totalorder %s216, 13
        %s218 = scalar_select %p217, %s216, 13
        %s219 = smul.u32 8, %s218
        %s220 = smul.u32 13, %s21
        %s221 = ssub.s32 25, %s220
        %p222 = scmp.lt.s32.totalorder %s221, 13
        %s223 = scalar_select %p222, %s221, 13
        %s224 = smul.u32 4, %s223
        %v225 = vld [vmem:[%s186] sm:$0xff]
        %v226 = vld [vmem:[%s186 + $0x8] sm:$0xff]
        %v227 = vld [vmem:[%s186 + $0x10] sm:$0xff]
        %v228 = vld [vmem:[%s186 + $0x18] sm:$0xff]
        %v229 = vld [vmem:[%s186 + $0x20] sm:$0xff]
        %v230 = vld [vmem:[%s186 + $0x28] sm:$0xff]
        %v231 = vld [vmem:[%s186 + $0x30] sm:$0xff]
        %v232 = vld [vmem:[%s186 + $0x38] sm:$0xff]
        %v233 = vld [vmem:[%s186 + $0x40] sm:$0xff]
        %v234 = vld [vmem:[%s186 + $0x48] sm:$0xff]
        %v235 = vld [vmem:[%s186 + $0x50] sm:$0xff]
        %v236 = vld [vmem:[%s186 + $0x58] sm:$0xff]
        %v237 = vld [vmem:[%s186 + $0x60] sm:$0xff]
        %v238 = vpack.c.bf16 %v226, %v225
        %v239 = vpack.c.bf16 %v228, %v227
        %v240 = vpack.c.bf16 %v230, %v229
        %v241 = vpack.c.bf16 %v232, %v231
        %v242 = vpack.c.bf16 %v234, %v233
        %v243 = vpack.c.bf16 %v236, %v235
        %v244 = vpack.c.bf16 %v237, %v237
        %v245 = vld [vmem:[#allocation5] sm:$0xf]
        %v246 = vld [vmem:[#allocation5 + $0x4] sm:$0xf]
        %v247 = vld [vmem:[#allocation5 + $0x8] sm:$0xf]
        %v248 = vld [vmem:[#allocation5 + $0xc] sm:$0xf]
        %v249 = vld [vmem:[#allocation5 + $0x10] sm:$0xf]
        %v250 = vld [vmem:[#allocation5 + $0x14] sm:$0xf]
        %v251 = vld [vmem:[#allocation5 + $0x18] sm:$0xf]
        %v252 = vld [vmem:[#allocation5 + $0x1c] sm:$0xf]
        %v253 = vld [vmem:[#allocation5 + $0x20] sm:$0xf]
        %v254 = vld [vmem:[#allocation5 + $0x24] sm:$0xf]
        %v255 = vld [vmem:[#allocation5 + $0x28] sm:$0xf]
        %v256 = vld [vmem:[#allocation5 + $0x2c] sm:$0xf]
        %v257 = vld [vmem:[#allocation5 + $0x30] sm:$0xf]
        %v258 = vld [vmem:[#allocation5 + $0x34] sm:$0xf]
        %v259 = vld [vmem:[#allocation5 + $0x38] sm:$0xf]
        %v260 = vld [vmem:[#allocation5 + $0x3c] sm:$0xf]
        %v261 = vld [vmem:[%s2] sm:$0x1]
        %v263 = vperm.slane %v261, 0
        %v281 = vunpack.c.l.b16 %v245
        %v282 = vunpack.c.l.b16 %v246
        %v283 = vunpack.c.l.b16 %v247
        %v284 = vunpack.c.l.b16 %v248
        %v285 = vunpack.c.l.b16 %v249
        %v286 = vunpack.c.l.b16 %v250
        %v287 = vunpack.c.l.b16 %v251
        %v288 = vunpack.c.l.b16 %v252
        %v289 = vunpack.c.l.b16 %v253
        %v290 = vunpack.c.l.b16 %v254
        %v291 = vunpack.c.l.b16 %v255
        %v292 = vunpack.c.l.b16 %v256
        %v293 = vunpack.c.l.b16 %v257
        %v294 = vunpack.c.l.b16 %v258
        %v295 = vunpack.c.l.b16 %v259
        %v296 = vunpack.c.l.b16 %v260
        %v297 = vpack.c.b16 %v282, %v281
        %v298 = vpack.c.b16 %v284, %v283
        %v299 = vpack.c.b16 %v286, %v285
        %v300 = vpack.c.b16 %v288, %v287
        %v301 = vpack.c.b16 %v290, %v289
        %v302 = vpack.c.b16 %v292, %v291
        %v303 = vpack.c.b16 %v294, %v293
        %v304 = vpack.c.b16 %v296, %v295
        %313 = vmatpush.bf16.msra.mxu0 %v304
        %314 = vmatpush.bf16.msra.mxu0 %v303
        %315 = vmatpush.bf16.msra.mxu0 %v302
        %316 = vmatpush.bf16.msra.mxu0 %v301
        %317 = vmatpush.bf16.msra.mxu0 %v300
        %318 = vmatpush.bf16.msra.mxu0 %v299
        %319 = vmatpush.bf16.msra.mxu0 %v298
        %320 = vmatpush.bf16.msra.mxu0 %v297
        %321 = vmatmul.bf16.gmra.mxu0 %v238
        %v322 = vpop.f32.mrf.mxu0
        %v323 = vadd.f32 %v263, %v322
        %v324 = vpop.f32.mrf.mxu0
        %v325 = vadd.f32 %v263, %v324
        %326 = vmatmul.bf16.gmra.mxu0 %v239
        %v327 = vpop.f32.mrf.mxu0
        %v328 = vadd.f32 %v263, %v327
        %v329 = vpop.f32.mrf.mxu0
        %v330 = vadd.f32 %v263, %v329
        %331 = vmatmul.bf16.gmra.mxu0 %v240
        %v332 = vpop.f32.mrf.mxu0
        %v333 = vadd.f32 %v263, %v332
        %v334 = vpop.f32.mrf.mxu0
        %v335 = vadd.f32 %v263, %v334
        %336 = vmatmul.bf16.gmra.mxu0 %v241
        %v337 = vpop.f32.mrf.mxu0
        %v338 = vadd.f32 %v263, %v337
        %v339 = vpop.f32.mrf.mxu0
        %v340 = vadd.f32 %v263, %v339
        %341 = vmatmul.bf16.gmra.mxu0 %v242
        %v342 = vpop.f32.mrf.mxu0
        %v343 = vadd.f32 %v263, %v342
        %v344 = vpop.f32.mrf.mxu0
        %v345 = vadd.f32 %v263, %v344
        %346 = vmatmul.bf16.gmra.mxu0 %v243
        %v347 = vpop.f32.mrf.mxu0
        %v348 = vadd.f32 %v263, %v347
        %v349 = vpop.f32.mrf.mxu0
        %v350 = vadd.f32 %v263, %v349
        %351 = vmatmul.bf16.gmra.mxu0 %v244
        %v352 = vpop.f32.mrf.mxu0
        %v353 = vadd.f32 %v263, %v352
        %v354 = vpop.f32.mrf.mxu0
        %355 = vdwg.mxu0
        %v356 = vpack.c.bf16 %v323, %v323
        %v357 = vpack.c.bf16 %v325, %v325
        %v358 = vpack.c.bf16 %v328, %v328
        %v359 = vpack.c.bf16 %v330, %v330
        %v360 = vpack.c.bf16 %v333, %v333
        %v361 = vpack.c.bf16 %v335, %v335
        %v362 = vpack.c.bf16 %v338, %v338
        %v363 = vpack.c.bf16 %v340, %v340
        %v364 = vpack.c.bf16 %v343, %v343
        %v365 = vpack.c.bf16 %v345, %v345
        %v366 = vpack.c.bf16 %v348, %v348
        %v367 = vpack.c.bf16 %v350, %v350
        %v368 = vpack.c.bf16 %v353, %v353
        %369 = vst [vmem:[%s214] sm:$0xf] %v356
        %370 = vst [vmem:[%s214 + $0x4] sm:$0xf] %v357
        %371 = vst [vmem:[%s214 + $0x8] sm:$0xf] %v358
        %372 = vst [vmem:[%s214 + $0xc] sm:$0xf] %v359
        %373 = vst [vmem:[%s214 + $0x10] sm:$0xf] %v360
        %374 = vst [vmem:[%s214 + $0x14] sm:$0xf] %v361
        %375 = vst [vmem:[%s214 + $0x18] sm:$0xf] %v362
        %376 = vst [vmem:[%s214 + $0x1c] sm:$0xf] %v363
        %377 = vst [vmem:[%s214 + $0x20] sm:$0xf] %v364
        %378 = vst [vmem:[%s214 + $0x24] sm:$0xf] %v365
        %379 = vst [vmem:[%s214 + $0x28] sm:$0xf] %v366
        %380 = vst [vmem:[%s214 + $0x2c] sm:$0xf] %v367
        %381 = vst [vmem:[%s214 + $0x30] sm:$0xf] %v368
        %s382 = sand.u32 %s97, 1
        %s383 = scalar_lea.sflag [#allocation4], %s382
        %s384 = sand.u32 %s97, 1
        %s385 = smul.addr %s384, 52
        %s386 = scalar_lea.vmem [#allocation7], %s385
        // Predicated region
        $region41: #{tpu_custom_call.1} parent=31 // pred_check
          %p387 = pneg %p107
        $region42: #{tpu_custom_call.1} parent=31 // pred_check_branch
          %389 = sbr.rel (%p387) target = $region44
        $region43: #{tpu_custom_call.1} parent=31 // pred_region
          %s390 = smul.u32 13, %s21
          %s391 = ssub.s32 25, %s390
          %p392 = scmp.lt.s32.totalorder %s391, 13
          %s393 = scalar_select %p392, %s391, 13
          %s394 = smul.u32 4, %s393
          %s395 = ssub.s32 52, %s394
          %s396 = sshll.u32 %s395, 4
          %397 = vsyncadd %s383, %s396
          %p398 = scmp.ne.s32.totalorder 0, %s394
          %s399 = smul.addr %s390, 4
          %s400 = scalar_lea.hbm %s3, %s399
          %s401 = smul.u32 4, %s393
          %s402 = sshll.u32 %s386, 4
          %s403 = int_to_ptr.vmem [resolvable:$true] %s402
          %s404 = sshll.u32 %s400, 4
          %s405 = int_to_ptr.hbm [resolvable:$true] %s404
          %s406 = sshll.u32 %s401, 4
          %410 = dma.vmem_to_hbm [thread:$0]  (%p398), %s403, %s406, %s405, %s383, 64, 64, 4
        $region44: #{tpu_custom_call.1} parent=31 // pred_fallthru
          _
      $region32: #{tpu_custom_call.1} parent=5 // pred_fallthru
        _
      %p411 = scmp.le.s32.totalorder 2, %s16
      // Predicated region
      $region45: #{tpu_custom_call.1} parent=5 // pred_check
        %p412 = pneg %p411
      $region46: #{tpu_custom_call.1} parent=5 // pred_check_branch
        %414 = sbr.rel (%p412) target = $region48
      $region47: #{tpu_custom_call.1} parent=5 // pred_region
        %s415 = ssub.s32 %s16, 2
        // Predicated region
        $region49: #{tpu_custom_call.1} parent=47 // pred_check
          %p416 = pneg %p113
        $region50: #{tpu_custom_call.1} parent=47 // pred_check_branch
          %418 = sbr.rel (%p416) target = $region52
        $region51: #{tpu_custom_call.1} parent=47 // pred_region
          %s419 = sand.u32 %s98, 1
          %s420 = scalar_lea.sflag [#allocation4], %s419
          %s421 = sand.u32 %s98, 1
          %s422 = smul.addr %s421, 52
          %s423 = scalar_lea.vmem [#allocation7], %s422
          %425 = dma.done %s420, 832
        $region52: #{tpu_custom_call.1} parent=47 // pred_fallthru
          _
      $region48: #{tpu_custom_call.1} parent=5 // pred_fallthru
        _
    $region6: #{tpu_custom_call.1} parent=1 // loop_footer
      %s20 = sadd.s32 1, %s16
    $region7: #{tpu_custom_call.1} parent=1 // loop_footer_branch
      %15 = sbr.rel target = $region3
    $region8: #{tpu_custom_call.1} parent=1 // loop_exit
      _
    %426 = vsyncpa [#allocation3], 1
    %s427 = scalar_lea.sflag [#allocation3], 1
    %428 = vsyncpa %s427, 1
    %429 = vsyncpa [#allocation6], 1
    %430 = vsyncpa [#allocation4], 1
    %s431 = scalar_lea.sflag [#allocation4], 1
    %432 = vsyncpa %s431, 1

</llo_original>
